<compile_context>
chip_gen: v5e
topology: v5e:2x2
jax: 0.10.0
libtpu: 0.0.40
codegen_flags: <defaults>
</compile_context>

<pallas_src>
import functools
import math

import jax
import jax.numpy as jnp
from jax import lax
from jax.experimental import pallas as pl
from jax.experimental.pallas import tpu as pltpu


def _long_range_kernel(feat_ref, posc_ref, posr_ref, wT_ref, b_ref,
                       out_ref, charges_ref, *,
                       n_atoms, sys_per_tile, tile_rows, n_tiles,
                       exclusion_radius, mxu_bf16):
    f32 = jnp.float32

    def mm(x):
        # bf16 MXU operands (default), f32 accumulation.
        return x.astype(jnp.bfloat16) if mxu_bf16 else x

    # ---- charges = Linear(features) for every row of this grid block.
    charges_ref[...] = (
        jnp.dot(mm(feat_ref[...]), mm(wT_ref[...]), preferred_element_type=f32)
        + b_ref[...])                                           # (M, Fp) f32

    # ---- block-diagonal pair mask for ONE tile, generated in-kernel.
    # 0.5 where (same system) and (i != j); folds the cross-system mask, the
    # self-interaction mask and the 1/2 double-count factor into one multiply.
    # System ids via indicator sums (no vector integer division).
    row_idx = lax.broadcasted_iota(jnp.int32, (tile_rows, 1), 0)
    col_idx = lax.broadcasted_iota(jnp.int32, (1, tile_rows), 1)

    def sys_id(idx):
        s = jnp.zeros_like(idx)
        for m in range(1, sys_per_tile):
            s = s + (idx >= m * n_atoms).astype(idx.dtype)
        return s

    same_sys = sys_id(row_idx) == sys_id(col_idx)               # (T, T)
    off_diag = row_idx != col_idx                               # (T, T)
    mask = jnp.where(same_sys & off_diag, 0.5, 0.0).astype(f32)

    pi_over_rc = math.pi / exclusion_radius

    # ---- loop over the diagonal pair tiles only (static trip count, small).
    for t in range(n_tiles):
        off = t * tile_rows
        pc = posc_ref[t]                                        # (T, 3)
        pr = posr_ref[t]                                        # (3, T)

        # pairwise squared distances via per-coordinate VPU broadcast diffs
        dx = pc[:, 0:1] - pr[0:1, :]
        dy = pc[:, 1:2] - pr[1:2, :]
        dz = pc[:, 2:3] - pr[2:3, :]
        r2 = jnp.maximum(dx * dx + dy * dy + dz * dz, 1e-12)

        # direct Coulomb kernel with smooth exclusion-radius removal
        inv_r = lax.rsqrt(r2)                   # EUP rsqrt (no sqrt + recip)
        r = r2 * inv_r                          # sqrt(r2) via one VPU multiply
        fcut = jnp.where(r < exclusion_radius,
                         0.5 * (jnp.cos(r * pi_over_rc) + 1.0), 0.0)
        v = inv_r * (1.0 - fcut) * mask                          # (T, T)

        # per-atom, per-channel potential for this tile's rows (MXU)
        q = charges_ref[pl.ds(off, tile_rows), :]                # (T, Fp) f32
        pot = jnp.dot(mm(v), mm(q), preferred_element_type=f32)  # (T, Fp)

        # long-range features = potential * charges (f32), lane-dense store
        out_ref[pl.ds(off, tile_rows), :] = (pot * q).astype(out_ref.dtype)


def _plan_tiles(n_systems, n_atoms, *, target_pair_tile=256, target_rows=512,
                max_rows=2048):
    """Pick (tile_rows, tiles_per_block, systems_per_block).

    tile_rows = k * n_atoms  : one pair tile holds k whole systems (the pair
                               matrix is block-diagonal, only diagonal tiles
                               are ever computed).
    systems_per_block        : k * tiles_per_block systems per grid step.
    """
    S, N = int(n_systems), int(n_atoms)

    # systems per pair tile: fill ~target_pair_tile lanes, stay within S.
    k = max(1, min(target_pair_tile // N if N < target_pair_tile else 1,
                   S, max(1, max_rows // N)))
    if k > 1:
        for kk in range(k, min(8 * k, S, max(1, max_rows // N)) + 1):
            if (kk * N) % 8 == 0:               # 8-sublane aligned tile rows
                k = kk
                break

    # pair tiles per grid block: amortize the ~0.35us/step pipeline overhead.
    tiles = max(1, min(target_rows // (k * N), -(-S // k)))

    # keep >= 2 grid steps when there are >= 2 systems (v7x has 2 TensorCores
    # and dimension_semantics=("parallel",) shards grid steps across them).
    while S >= 2 and -(-S // (tiles * k)) < 2:
        if tiles > 1:
            tiles -= 1
        elif k > 1:
            k = min(k - 1, -(-S // 2))
        else:
            break

    # block legality: rows per block must be a multiple of 8 sublanes unless
    # there is a single block covering the whole (padded) array.
    bs = tiles * k
    if -(-S // bs) > 1 and (bs * N) % 8 != 0:
        k = min(k, S)
        tiles = -(-S // k)
        bs = tiles * k
    return k * N, tiles, bs


def long_range_featurizer(features, positions, weight, bias, *,
                          exclusion_radius, mxu_bf16=True, return_padded=False):
    """features: (S, N, F) f32, positions: (S, N, 3) f32,
       weight: (F, F) (torch Linear layout, out x in), bias: (F,).
       Returns (S*N, F) long-range features (systems concatenated), or the
       lane-padded (S*N, Fp) array if return_padded=True."""
    features = jnp.asarray(features, jnp.float32)
    positions = jnp.asarray(positions, jnp.float32)
    S, N, F = features.shape
    Fp = max(128, ((F + 127) // 128) * 128)     # lane-dense padded feature dim

    # chip-aware budgets (v7x: 64 MiB VMEM; v5e/v6e: 128 MiB).
    try:
        vmem_cap = int(getattr(pltpu.get_tpu_info(), "vmem_capacity_bytes",
                               64 * 1024 * 1024))
    except Exception:  # pragma: no cover - conservative fallback
        vmem_cap = 64 * 1024 * 1024
    target_rows = 1024 if vmem_cap >= (96 << 20) else 512
    max_rows = 2 * target_rows

    T, nt, Bs = _plan_tiles(S, N, target_pair_tile=256,
                            target_rows=target_rows, max_rows=max_rows)
    nblk = -(-S // Bs)
    S_pad = nblk * Bs
    M = Bs * N                                  # atom rows per grid step

    # Pad with all-zero dummy systems so the grid tiles evenly.  Dummy rows are
    # finite (r2 is clamped, fcut -> 1 at r -> 0), never interact with real
    # systems (block-diagonal mask), and are sliced off below.
    if S_pad != S:
        features = jnp.concatenate(
            [features, jnp.zeros((S_pad - S, N, F), jnp.float32)], axis=0)
        positions = jnp.concatenate(
            [positions, jnp.zeros((S_pad - S, N, 3), jnp.float32)], axis=0)

    # Linear parameters, output-dim padded to Fp lanes (padded cols are zero,
    # so padded charges / potential / output columns are exactly zero).
    wT = jnp.zeros((F, Fp), jnp.float32).at[:, :F].set(
        jnp.asarray(weight, jnp.float32).T)
    b = jnp.zeros((1, Fp), jnp.float32).at[:, :F].set(
        jnp.asarray(bias, jnp.float32)[None, :])

    # Wrapper-side layout plumbing (rows ordered (system, atom) throughout).
    feats2d = features.reshape(S_pad * N, F)
    pos_cols = positions.reshape(nblk * nt, T, 3)          # per-tile (T, 3)
    pos_rows = jnp.transpose(pos_cols, (0, 2, 1))          # per-tile (3, T)

    # Explicit VMEM budget: blocks are double-buffered; pair-tile temporaries
    # are now O(T^2), not O(M^2).
    est_bytes = 4 * (2 * M * F + 2 * nt * T * 128 + 2 * nt * 8 * max(T, 128)
                     + 2 * F * Fp + 2 * Fp + 4 * M * Fp + M * Fp
                     + 10 * T * T)
    vmem_limit = int(min(int(0.75 * vmem_cap),
                         max(32 * 1024 * 1024, 2 * est_bytes)))

    kernel = functools.partial(
        _long_range_kernel, n_atoms=N, sys_per_tile=T // N, tile_rows=T,
        n_tiles=nt, exclusion_radius=float(exclusion_radius),
        mxu_bf16=bool(mxu_bf16))

    out = pl.pallas_call(
        kernel,
        out_shape=jax.ShapeDtypeStruct((S_pad * N, Fp), jnp.float32),
        grid=(nblk,),
        in_specs=[
            pl.BlockSpec((M, F), lambda i: (i, 0)),          # feature rows
            pl.BlockSpec((nt, T, 3), lambda i: (i, 0, 0)),   # positions (T,3)/tile
            pl.BlockSpec((nt, 3, T), lambda i: (i, 0, 0)),   # positions (3,T)/tile
            pl.BlockSpec((F, Fp), lambda i: (0, 0)),         # W.T (shared)
            pl.BlockSpec((1, Fp), lambda i: (0, 0)),         # bias (shared)
        ],
        out_specs=pl.BlockSpec((M, Fp), lambda i: (i, 0)),   # lane-dense output
        scratch_shapes=[pltpu.VMEM((M, Fp), jnp.float32)],   # charges scratch
        compiler_params=pltpu.CompilerParams(
            dimension_semantics=("parallel",),
            vmem_limit_bytes=vmem_limit),
    )(feats2d, pos_cols, pos_rows, wT, b)

    if return_padded:
        return out[:S * N, :]
    return out[:S * N, :F]


def _reference(features, positions, weight, bias, exclusion_radius):
    """Pure-JAX reference mirroring the per-system torch loop (f32)."""
    S, N, F = features.shape
    charges = features @ weight.T + bias
    outs = []
    for s in range(S):
        q = charges[s]
        p = positions[s]
        diff = p[:, None, :] - p[None, :, :]
        r = jnp.sqrt(jnp.maximum(jnp.sum(diff * diff, axis=-1), 1e-12))
        fcut = jnp.where(r < exclusion_radius,
                         0.5 * (jnp.cos(r * (jnp.pi / exclusion_radius)) + 1.0),
                         0.0)
        v = (1.0 / r) * (1.0 - fcut)
        v = v * (1.0 - jnp.eye(N, dtype=v.dtype))
        pot = 0.5 * (v @ q)
        outs.append(pot * q)
    return jnp.concatenate(outs, axis=0)


if __name__ == "__main__":
    # Small deterministic example: 2 systems, 16 atoms each, feature_dim=32.
    S, N, F = 2, 16, 32
    exclusion_radius = 2.5   # neighbor_list_options.cutoff

    key = jax.random.PRNGKey(0)
    k_feat, k_pos, k_w, k_b = jax.random.split(key, 4)
    features = jax.random.normal(k_feat, (S, N, F), dtype=jnp.float32)
    positions = jax.random.uniform(k_pos, (S, N, 3), dtype=jnp.float32,
                                   minval=0.0, maxval=6.0)
    # charges_map = nn.Linear(feature_dim, feature_dim): weight (F, F), bias (F,)
    weight = jax.random.normal(k_w, (F, F), dtype=jnp.float32) / jnp.sqrt(F)
    bias = 0.01 * jax.random.normal(k_b, (F,), dtype=jnp.float32)

    ref = _reference(features, positions, weight, bias, exclusion_radius)

    # Exact path (f32 MXU operands): validates the kernel structure tightly.
    out_f32 = long_range_featurizer(features, positions, weight, bias,
                                    exclusion_radius=exclusion_radius,
                                    mxu_bf16=False)
    out_f32 = jax.block_until_ready(out_f32)
    assert out_f32.shape == (S * N, F)
    assert bool(jnp.all(jnp.isfinite(out_f32)))
    assert bool(jnp.allclose(out_f32, ref, rtol=2e-2, atol=2e-3)), \
        "f32 path mismatch vs reference"

    # Default fast path (bf16 MXU operands, f32 accumulation).
    out = long_range_featurizer(features, positions, weight, bias,
                                exclusion_radius=exclusion_radius)
    out = jax.block_until_ready(out)
    assert out.shape == (S * N, F)
    assert bool(jnp.all(jnp.isfinite(out)))
    rel = float(jnp.linalg.norm(out - ref) /
                (float(jnp.linalg.norm(ref)) + 1e-30))
    assert rel < 5e-2, f"bf16 path relative error too large: {rel}"

    print("KERNEL_OK")
</pallas_src>

<mosaic_0001>
module attributes {stable_mosaic.version = 11 : i64} {
  func.func @_long_range_kernel(%arg0: i32, %arg1: memref<16x32xf32, #tpu.memory_space<vmem>>, %arg2: memref<1x16x3xf32, #tpu.memory_space<vmem>>, %arg3: memref<1x3x16xf32, #tpu.memory_space<vmem>>, %arg4: memref<32x128xf32, #tpu.memory_space<vmem>>, %arg5: memref<1x128xf32, #tpu.memory_space<vmem>>, %arg6: memref<16x128xf32, #tpu.memory_space<vmem>>, %arg7: memref<16x128xf32, #tpu.memory_space<vmem>>) attributes {dimension_semantics = [#tpu.dimension_semantics<parallel>], iteration_bounds = array<i64: 2>, scalar_prefetch = 0 : i64, scratch_operands = 1 : i64, tpu.core_type = #tpu.core_type<tc>, window_params = [{transform_indices = @transform_0, window_bounds = array<i64: 16, 32>}, {transform_indices = @transform_1, window_bounds = array<i64: 1, 16, 3>}, {transform_indices = @transform_2, window_bounds = array<i64: 1, 3, 16>}, {pipeline_mode = #tpu.pipeline_mode<synchronous>, transform_indices = @transform_3, window_bounds = array<i64: 32, 128>}, {pipeline_mode = #tpu.pipeline_mode<synchronous>, transform_indices = @transform_4, window_bounds = array<i64: 1, 128>}, {transform_indices = @transform_5, window_bounds = array<i64: 16, 128>}]} {
    %c0 = arith.constant 0 : index
    %c0_0 = arith.constant 0 : index
    %0 = vector.load %arg1[%c0, %c0_0] : memref<16x32xf32, #tpu.memory_space<vmem>>, vector<16x32xf32>
    %c0_1 = arith.constant 0 : index
    %c0_2 = arith.constant 0 : index
    %1 = vector.load %arg4[%c0_1, %c0_2] : memref<32x128xf32, #tpu.memory_space<vmem>>, vector<32x128xf32>
    %cst = arith.constant dense<0.000000e+00> : vector<16x128xf32>
    %2 = tpu.matmul %0, %1, %cst {dimension_numbers = #tpu.dot_dimension_numbers<[1], [0], [0], [1], [0, 0, 1, 1], [], []>} : vector<16x32xf32>, vector<32x128xf32>, vector<16x128xf32> -> vector<16x128xf32>
    %c0_3 = arith.constant 0 : index
    %c0_4 = arith.constant 0 : index
    %3 = vector.load %arg5[%c0_3, %c0_4] : memref<1x128xf32, #tpu.memory_space<vmem>>, vector<1x128xf32>
    %4 = vector.broadcast %3 : vector<1x128xf32> to vector<16x128xf32>
    %5 = arith.addf %2, %4 : vector<16x128xf32>
    %c0_5 = arith.constant 0 : index
    %c0_6 = arith.constant 0 : index
    %6 = vector.load %arg7[%c0_5, %c0_6] : memref<16x128xf32, #tpu.memory_space<vmem>>, vector<16x128xf32>
    tpu.vector_store %arg7[%c0_5, %c0_6], %5 {strides = array<i32>} : memref<16x128xf32, #tpu.memory_space<vmem>>, vector<16x128xf32>,
    %7 = tpu.iota {dimensions = array<i32: 0>} : vector<16x1xi32>
    %8 = tpu.iota {dimensions = array<i32: 1>} : vector<1x16xi32>
    %c0_i32 = arith.constant 0 : i32
    %9 = vector.broadcast %c0_i32 : i32 to vector<16x1xi32>
    %c0_i32_7 = arith.constant 0 : i32
    %10 = vector.broadcast %c0_i32_7 : i32 to vector<1x16xi32>
    %11 = vector.broadcast %9 : vector<16x1xi32> to vector<16x16xi32>
    %12 = vector.broadcast %10 : vector<1x16xi32> to vector<16x16xi32>
    %13 = arith.cmpi eq, %11, %12 : vector<16x16xi32>
    %14 = vector.broadcast %7 : vector<16x1xi32> to vector<16x16xi32>
    %15 = vector.broadcast %8 : vector<1x16xi32> to vector<16x16xi32>
    %16 = arith.cmpi ne, %14, %15 : vector<16x16xi32>
    %17 = arith.andi %13, %16 : vector<16x16xi1>
    %cst_8 = arith.constant 5.000000e-01 : f32
    %cst_9 = arith.constant 0.000000e+00 : f32
    %18 = vector.broadcast %cst_8 : f32 to vector<16x16xf32>
    %19 = vector.broadcast %cst_9 : f32 to vector<16x16xf32>
    %20 = arith.select %17, %18, %19 : vector<16x16xi1>, vector<16x16xf32>
    %c0_10 = arith.constant 0 : index
    %c0_11 = arith.constant 0 : index
    %c0_12 = arith.constant 0 : index
    %21 = vector.load %arg2[%c0_10, %c0_11, %c0_12] : memref<1x16x3xf32, #tpu.memory_space<vmem>>, vector<1x16x3xf32>
    %22 = vector.shape_cast %21 : vector<1x16x3xf32> to vector<16x3xf32>
    %c0_13 = arith.constant 0 : index
    %c0_14 = arith.constant 0 : index
    %c0_15 = arith.constant 0 : index
    %23 = vector.load %arg3[%c0_13, %c0_14, %c0_15] : memref<1x3x16xf32, #tpu.memory_space<vmem>>, vector<1x3x16xf32>
    %24 = vector.shape_cast %23 : vector<1x3x16xf32> to vector<3x16xf32>
    %25 = vector.extract_strided_slice %22 {offsets = [0, 0], sizes = [16, 1], strides = [1, 1]} : vector<16x3xf32> to vector<16x1xf32>
    %26 = vector.extract_strided_slice %24 {offsets = [0, 0], sizes = [1, 16], strides = [1, 1]} : vector<3x16xf32> to vector<1x16xf32>
    %27 = vector.broadcast %25 : vector<16x1xf32> to vector<16x16xf32>
    %28 = vector.broadcast %26 : vector<1x16xf32> to vector<16x16xf32>
    %29 = arith.subf %27, %28 : vector<16x16xf32>
    %30 = vector.extract_strided_slice %22 {offsets = [0, 1], sizes = [16, 1], strides = [1, 1]} : vector<16x3xf32> to vector<16x1xf32>
    %31 = vector.extract_strided_slice %24 {offsets = [1, 0], sizes = [1, 16], strides = [1, 1]} : vector<3x16xf32> to vector<1x16xf32>
    %32 = vector.broadcast %30 : vector<16x1xf32> to vector<16x16xf32>
    %33 = vector.broadcast %31 : vector<1x16xf32> to vector<16x16xf32>
    %34 = arith.subf %32, %33 : vector<16x16xf32>
    %35 = vector.extract_strided_slice %22 {offsets = [0, 2], sizes = [16, 1], strides = [1, 1]} : vector<16x3xf32> to vector<16x1xf32>
    %36 = vector.extract_strided_slice %24 {offsets = [2, 0], sizes = [1, 16], strides = [1, 1]} : vector<3x16xf32> to vector<1x16xf32>
    %37 = vector.broadcast %35 : vector<16x1xf32> to vector<16x16xf32>
    %38 = vector.broadcast %36 : vector<1x16xf32> to vector<16x16xf32>
    %39 = arith.subf %37, %38 : vector<16x16xf32>
    %40 = arith.mulf %29, %29 : vector<16x16xf32>
    %41 = arith.mulf %34, %34 : vector<16x16xf32>
    %42 = arith.addf %40, %41 : vector<16x16xf32>
    %43 = arith.mulf %39, %39 : vector<16x16xf32>
    %44 = arith.addf %42, %43 : vector<16x16xf32>
    %cst_16 = arith.constant 9.99999996E-13 : f32
    %45 = vector.broadcast %cst_16 : f32 to vector<16x16xf32>
    %46 = arith.maximumf %44, %45 : vector<16x16xf32>
    %47 = math.rsqrt %46 : vector<16x16xf32>
    %48 = arith.mulf %46, %47 : vector<16x16xf32>
    %cst_17 = arith.constant 2.500000e+00 : f32
    %49 = vector.broadcast %cst_17 : f32 to vector<16x16xf32>
    %50 = arith.cmpf olt, %48, %49 : vector<16x16xf32>
    %cst_18 = arith.constant 1.2566371 : f32
    %51 = vector.broadcast %cst_18 : f32 to vector<16x16xf32>
    %52 = arith.mulf %48, %51 : vector<16x16xf32>
    %53 = math.cos %52 : vector<16x16xf32>
    %cst_19 = arith.constant 1.000000e+00 : f32
    %54 = vector.broadcast %cst_19 : f32 to vector<16x16xf32>
    %55 = arith.addf %53, %54 : vector<16x16xf32>
    %cst_20 = arith.constant 5.000000e-01 : f32
    %56 = vector.broadcast %cst_20 : f32 to vector<16x16xf32>
    %57 = arith.mulf %56, %55 : vector<16x16xf32>
    %cst_21 = arith.constant 0.000000e+00 : f32
    %58 = vector.broadcast %cst_21 : f32 to vector<16x16xf32>
    %59 = arith.select %50, %57, %58 : vector<16x16xi1>, vector<16x16xf32>
    %cst_22 = arith.constant 1.000000e+00 : f32
    %60 = vector.broadcast %cst_22 : f32 to vector<16x16xf32>
    %61 = arith.subf %60, %59 : vector<16x16xf32>
    %62 = arith.mulf %47, %61 : vector<16x16xf32>
    %63 = arith.mulf %62, %20 : vector<16x16xf32>
    %c0_23 = arith.constant 0 : index
    %c0_24 = arith.constant 0 : index
    %64 = vector.load %arg7[%c0_23, %c0_24] : memref<16x128xf32, #tpu.memory_space<vmem>>, vector<16x128xf32>
    %cst_25 = arith.constant dense<0.000000e+00> : vector<16x128xf32>
    %65 = tpu.matmul %63, %64, %cst_25 {dimension_numbers = #tpu.dot_dimension_numbers<[1], [0], [0], [1], [0, 0, 1, 1], [], []>} : vector<16x16xf32>, vector<16x128xf32>, vector<16x128xf32> -> vector<16x128xf32>
    %66 = arith.mulf %65, %64 : vector<16x128xf32>
    %c0_26 = arith.constant 0 : index
    %c0_27 = arith.constant 0 : index
    %67 = vector.load %arg6[%c0_26, %c0_27] : memref<16x128xf32, #tpu.memory_space<vmem>>, vector<16x128xf32>
    tpu.vector_store %arg6[%c0_26, %c0_27], %66 {strides = array<i32>} : memref<16x128xf32, #tpu.memory_space<vmem>>, vector<16x128xf32>,
    return
  }
  func.func @transform_0(%arg0: i32) -> (i32, i32) {
    %c0_i32 = arith.constant 0 : i32
    %c0_i32_0 = arith.constant 0 : i32
    return %arg0, %c0_i32 : i32, i32
  }
  func.func @transform_1(%arg0: i32) -> (i32, i32, i32) {
    %c0_i32 = arith.constant 0 : i32
    %c0_i32_0 = arith.constant 0 : i32
    %c0_i32_1 = arith.constant 0 : i32
    return %arg0, %c0_i32, %c0_i32_0 : i32, i32, i32
  }
  func.func @transform_2(%arg0: i32) -> (i32, i32, i32) {
    %c0_i32 = arith.constant 0 : i32
    %c0_i32_0 = arith.constant 0 : i32
    %c0_i32_1 = arith.constant 0 : i32
    return %arg0, %c0_i32, %c0_i32_0 : i32, i32, i32
  }
  func.func @transform_3(%arg0: i32) -> (i32, i32) {
    %c0_i32 = arith.constant 0 : i32
    %c0_i32_0 = arith.constant 0 : i32
    %c0_i32_1 = arith.constant 0 : i32
    return %c0_i32, %c0_i32_0 : i32, i32
  }
  func.func @transform_4(%arg0: i32) -> (i32, i32) {
    %c0_i32 = arith.constant 0 : i32
    %c0_i32_0 = arith.constant 0 : i32
    %c0_i32_1 = arith.constant 0 : i32
    return %c0_i32, %c0_i32_0 : i32, i32
  }
  func.func @transform_5(%arg0: i32) -> (i32, i32) {
    %c0_i32 = arith.constant 0 : i32
    %c0_i32_0 = arith.constant 0 : i32
    return %arg0, %c0_i32 : i32, i32
  }
}

</mosaic_0001>

<llo_original>
// kernel: tpu_custom_call.1
$region0: #{tpu_custom_call.1}
  #allocation0 [shape = 'u32[]', space=smem, size = 0x4, offset = 0x4, fixed_abs, tag = 'smem constant byte address 0x4 - core index']
  #allocation1 [shape = 'u32[72,128]{1,0:T(1,128)}', space=vmem, size = 0x9000, scoped, tag = 'internal scratch']
  #allocation2 [shape = 'f32[16,128]{1,0:T(8,128)}', space=vmem, size = 0x2000, scoped, tag = 'scratch operand']
  %s0 = inlined_call_operand.vmem [shape: f32[32,32], index: 0, kind: input, shape index: {}]
  %s1 = inlined_call_operand.vmem [shape: f32[2,16,3], index: 1, kind: input, shape index: {}]
  %s2 = inlined_call_operand.vmem [shape: f32[2,3,16], index: 2, kind: input, shape index: {}]
  %s3 = inlined_call_operand.hbm [shape: f32[32,128], index: 3, kind: input, shape index: {}]
  %s4 = inlined_call_operand.vmem [shape: f32[1,128], index: 4, kind: input, shape index: {}]
  %s5 = inlined_call_operand.hbm [shape: f32[32,128], index: 5, kind: output, shape index: {}]
  %s6 = sld [smem:[#allocation0]]
  $region57: #{tpu_custom_call.1} parent=0
    _
  %s8 = ssub.s32 1, %s6
  %s9 = scalar_select 0, %s8, %s6
  $region1: #{tpu_custom_call.1} parent=0
    #allocation3 [shape = 'u8[16384]{0}', space=vmem, size = 0x4000, scoped, tag = 'input window, operand 3, single buffered']
    #allocation4 [shape = 's32[2]{0}', space=sflag, size = 0x8, scoped, tag = 'scoped memory for tpu_custom_call.1']
    #allocation5 [shape = 's32[2]{0}', space=sflag, size = 0x8, scoped, tag = 'scoped memory for tpu_custom_call.1']
    #allocation6 [shape = 'u8[16384]{0}', space=vmem, size = 0x4000, scoped, tag = 'output window, operand 0']
    %10 = vsyncpa [#allocation4], 0
    %11 = vsyncpa [#allocation5], 0
    %s12 = scalar_lea.sflag [#allocation5], 1
    %13 = vsyncpa %s12, 0
    loop: start=0, step=1, limit=4
    $region2: #{tpu_custom_call.1} parent=1 // loop_pre_header
      _
    $region3: #{tpu_custom_call.1} parent=1 // loop_header
      %s15 = sphi 0, %s19
      %p16 = scmp.ge.s32.totalorder %s15, 4
      %s25 = sphi 0, %s27
      %s28 = sphi 0, %s25
      %s29 = sphi 0, %s28
      %s45 = sphi 0, %s29
      %s51 = sphi 0, %s53
      %s54 = sphi 0, %s51
      %s55 = sphi 0, %s54
      %s71 = sphi 0, %s55
      %s77 = sphi 0, %s79
      %s80 = sphi 0, %s77
      %s81 = sphi 0, %s80
      %s97 = sphi 0, %s81
      %s101 = sphi 0, %s101
      %s103 = sphi 0, %s101
      %s104 = sphi 0, %s103
      %s118 = sphi 0, %s104
      %s122 = sphi 0, %s122
      %s124 = sphi 0, %s122
      %s125 = sphi 0, %s124
      %s139 = sphi 0, %s125
      %s145 = sphi 0, %s147
      %s148 = sphi 0, %s145
      %s149 = sphi 0, %s148
      %s165 = sphi 0, %s149
    $region4: #{tpu_custom_call.1} parent=1 // loop_header_branch
      %18 = sbr.rel (%p16) target = $region8
    $region5: #{tpu_custom_call.1} parent=1 // loop_body
      %s20 = ssub.s32 %s15, 1
      %s21 = ssub.s32 %s15, 2
      %s22 = sadd.s32 %s15, 1
      %s23 = ssub.s32 %s15, %s22
      %p24 = scmp.eq.s32.totalorder %s23, 0
      %s26 = sadd.s32 %s25, 1
      %s27 = scalar_select %p24, %s25, %s26
      %p30 = pneg %p24
      %p31 = scmp.eq.s32.totalorder %s15, 1
      %p32 = por %p30, %p31
      %p33 = scmp.ne.s32.totalorder %s25, %s28
      %p34 = scmp.eq.s32.totalorder %s15, 0
      %p35 = por %p33, %p34
      %p36 = scmp.ne.s32.totalorder %s25, %s28
      %p37 = scmp.eq.s32.totalorder %s20, 1
      %p38 = por %p36, %p37
      %p39 = scmp.ne.s32.totalorder %s28, %s29
      %p40 = scmp.eq.s32.totalorder %s20, 0
      %p41 = por %p39, %p40
      %p42 = scmp.ne.s32.totalorder %s28, %s29
      %p43 = scmp.eq.s32.totalorder %s21, 1
      %p44 = por %p42, %p43
      %p46 = scmp.ne.s32.totalorder %s29, %s45
      %p47 = scmp.eq.s32.totalorder %s21, 0
      %p48 = por %p46, %p47
      %s49 = ssub.s32 %s15, %s22
      %p50 = scmp.eq.s32.totalorder %s49, 0
      %s52 = sadd.s32 %s51, 1
      %s53 = scalar_select %p50, %s51, %s52
      %p56 = pneg %p50
      %p57 = scmp.eq.s32.totalorder %s15, 1
      %p58 = por %p56, %p57
      %p59 = scmp.ne.s32.totalorder %s51, %s54
      %p60 = scmp.eq.s32.totalorder %s15, 0
      %p61 = por %p59, %p60
      %p62 = scmp.ne.s32.totalorder %s51, %s54
      %p63 = scmp.eq.s32.totalorder %s20, 1
      %p64 = por %p62, %p63
      %p65 = scmp.ne.s32.totalorder %s54, %s55
      %p66 = scmp.eq.s32.totalorder %s20, 0
      %p67 = por %p65, %p66
      %p68 = scmp.ne.s32.totalorder %s54, %s55
      %p69 = scmp.eq.s32.totalorder %s21, 1
      %p70 = por %p68, %p69
      %p72 = scmp.ne.s32.totalorder %s55, %s71
      %p73 = scmp.eq.s32.totalorder %s21, 0
      %p74 = por %p72, %p73
      %s75 = ssub.s32 %s15, %s22
      %p76 = scmp.eq.s32.totalorder %s75, 0
      %s78 = sadd.s32 %s77, 1
      %s79 = scalar_select %p76, %s77, %s78
      %p82 = pneg %p76
      %p83 = scmp.eq.s32.totalorder %s15, 1
      %p84 = por %p82, %p83
      %p85 = scmp.ne.s32.totalorder %s77, %s80
      %p86 = scmp.eq.s32.totalorder %s15, 0
      %p87 = por %p85, %p86
      %p88 = scmp.ne.s32.totalorder %s77, %s80
      %p89 = scmp.eq.s32.totalorder %s20, 1
      %p90 = por %p88, %p89
      %p91 = scmp.ne.s32.totalorder %s80, %s81
      %p92 = scmp.eq.s32.totalorder %s20, 0
      %p93 = por %p91, %p92
      %p94 = scmp.ne.s32.totalorder %s80, %s81
      %p95 = scmp.eq.s32.totalorder %s21, 1
      %p96 = por %p94, %p95
      %p98 = scmp.ne.s32.totalorder %s81, %s97
      %p99 = scmp.eq.s32.totalorder %s21, 0
      %p100 = por %p98, %p99
      %s102 = sadd.s32 %s101, 1
      %p105 = scmp.eq.s32.totalorder %s15, 1
      %p106 = scmp.ne.s32.totalorder %s101, %s103
      %p107 = scmp.eq.s32.totalorder %s15, 0
      %p108 = por %p106, %p107
      %p109 = scmp.ne.s32.totalorder %s101, %s103
      %p110 = scmp.eq.s32.totalorder %s20, 1
      %p111 = por %p109, %p110
      %p112 = scmp.ne.s32.totalorder %s103, %s104
      %p113 = scmp.eq.s32.totalorder %s20, 0
      %p114 = por %p112, %p113
      %p115 = scmp.ne.s32.totalorder %s103, %s104
      %p116 = scmp.eq.s32.totalorder %s21, 1
      %p117 = por %p115, %p116
      %p119 = scmp.ne.s32.totalorder %s104, %s118
      %p120 = scmp.eq.s32.totalorder %s21, 0
      %p121 = por %p119, %p120
      %s123 = sadd.s32 %s122, 1
      %p126 = scmp.eq.s32.totalorder %s15, 1
      %p127 = scmp.ne.s32.totalorder %s122, %s124
      %p128 = scmp.eq.s32.totalorder %s15, 0
      %p129 = por %p127, %p128
      %p130 = scmp.ne.s32.totalorder %s122, %s124
      %p131 = scmp.eq.s32.totalorder %s20, 1
      %p132 = por %p130, %p131
      %p133 = scmp.ne.s32.totalorder %s124, %s125
      %p134 = scmp.eq.s32.totalorder %s20, 0
      %p135 = por %p133, %p134
      %p136 = scmp.ne.s32.totalorder %s124, %s125
      %p137 = scmp.eq.s32.totalorder %s21, 1
      %p138 = por %p136, %p137
      %p140 = scmp.ne.s32.totalorder %s125, %s139
      %p141 = scmp.eq.s32.totalorder %s21, 0
      %p142 = por %p140, %p141
      %s143 = ssub.s32 %s15, %s22
      %p144 = scmp.eq.s32.totalorder %s143, 0
      %s146 = sadd.s32 %s145, 1
      %s147 = scalar_select %p144, %s145, %s146
      %p150 = pneg %p144
      %p151 = scmp.eq.s32.totalorder %s15, 1
      %p152 = por %p150, %p151
      %p153 = scmp.ne.s32.totalorder %s145, %s148
      %p154 = scmp.eq.s32.totalorder %s15, 0
      %p155 = por %p153, %p154
      %p156 = scmp.ne.s32.totalorder %s145, %s148
      %p157 = scmp.eq.s32.totalorder %s20, 1
      %p158 = por %p156, %p157
      %p159 = scmp.ne.s32.totalorder %s148, %s149
      %p160 = scmp.eq.s32.totalorder %s20, 0
      %p161 = por %p159, %p160
      %p162 = scmp.ne.s32.totalorder %s148, %s149
      %p163 = scmp.eq.s32.totalorder %s21, 1
      %p164 = por %p162, %p163
      %p166 = scmp.ne.s32.totalorder %s149, %s165
      %p167 = scmp.eq.s32.totalorder %s21, 0
      %p168 = por %p166, %p167
      %p169 = scmp.le.s32.totalorder 1, %s15
      %p170 = scmp.lt.s32.totalorder %s15, 3
      %p171 = pnand %p169, %p170
      %p172 = pneg %p171
      // Predicated region
      $region9: #{tpu_custom_call.1} parent=5 // pred_check
        _
      $region10: #{tpu_custom_call.1} parent=5 // pred_check_branch
        %174 = sbr.rel (%p171) target = $region12
      $region11: #{tpu_custom_call.1} parent=5 // pred_region
        %s175 = ssub.s32 %s15, 1
        // Predicated region
        $region13: #{tpu_custom_call.1} parent=11 // pred_check
          %p176 = pneg %p114
        $region14: #{tpu_custom_call.1} parent=11 // pred_check_branch
          %178 = sbr.rel (%p176) target = $region16
        $region15: #{tpu_custom_call.1} parent=11 // pred_region
          %180 = vsyncadd [#allocation4], 0
          %s181 = sshll.u32 %s3, 4
          %s182 = int_to_ptr.hbm [resolvable:$true] %s181
          %s183 = sshll.u32 [#allocation3], 4
          %s184 = int_to_ptr.vmem [resolvable:$true] %s183
          %189 = dma.hbm_to_vmem [thread:$0]  %s182, 512, %s184, [#allocation4], 128, 128, 8
        $region16: #{tpu_custom_call.1} parent=11 // pred_fallthru
          _
        // Predicated region
        $region17: #{tpu_custom_call.1} parent=11 // pred_check
          %p190 = pneg %p135
        $region18: #{tpu_custom_call.1} parent=11 // pred_check_branch
          %192 = sbr.rel (%p190) target = $region20
        $region19: #{tpu_custom_call.1} parent=11 // pred_region
          _
        $region20: #{tpu_custom_call.1} parent=11 // pred_fallthru
          _
      $region12: #{tpu_custom_call.1} parent=5 // pred_fallthru
        _
      %p193 = scmp.lt.s32.totalorder %s15, 2
      // Predicated region
      $region21: #{tpu_custom_call.1} parent=5 // pred_check
        %p194 = pneg %p193
      $region22: #{tpu_custom_call.1} parent=5 // pred_check_branch
        %196 = sbr.rel (%p194) target = $region24
      $region23: #{tpu_custom_call.1} parent=5 // pred_region
        // Predicated region
        $region25: #{tpu_custom_call.1} parent=23 // pred_check
          %p197 = pneg %p35
        $region26: #{tpu_custom_call.1} parent=23 // pred_check_branch
          %199 = sbr.rel (%p197) target = $region28
        $region27: #{tpu_custom_call.1} parent=23 // pred_region
          %s200 = smul.u32 2, %s15
          %p201 = scmp.lt.s32.totalorder %s200, 3
          %s202 = scalar_select %p201, %s200, 3
          %s203 = smul.addr %s202, 8
          %s204 = scalar_lea.vmem %s0, %s203
          %s205 = smul.u32 2, %s15
        $region28: #{tpu_custom_call.1} parent=23 // pred_fallthru
          _
        // Predicated region
        $region29: #{tpu_custom_call.1} parent=23 // pred_check
          %p206 = pneg %p61
        $region30: #{tpu_custom_call.1} parent=23 // pred_check_branch
          %208 = sbr.rel (%p206) target = $region32
        $region31: #{tpu_custom_call.1} parent=23 // pred_region
          %p209 = scmp.lt.s32.totalorder %s15, 1
          %s210 = scalar_select %p209, %s15, 1
          %s211 = smul.addr %s210, 2
          %s212 = smul.addr %s211, 8
          %s213 = scalar_lea.vmem %s1, %s212
        $region32: #{tpu_custom_call.1} parent=23 // pred_fallthru
          _
        // Predicated region
        $region33: #{tpu_custom_call.1} parent=23 // pred_check
          %p214 = pneg %p87
        $region34: #{tpu_custom_call.1} parent=23 // pred_check_branch
          %216 = sbr.rel (%p214) target = $region36
        $region35: #{tpu_custom_call.1} parent=23 // pred_region
          %p217 = scmp.lt.s32.totalorder %s15, 1
          %s218 = scalar_select %p217, %s15, 1
          %s219 = smul.addr %s218, 4
          %s220 = scalar_lea.vmem %s2, %s219
        $region36: #{tpu_custom_call.1} parent=23 // pred_fallthru
          _
      $region24: #{tpu_custom_call.1} parent=5 // pred_fallthru
        _
      %p221 = scmp.le.s32.totalorder 1, %s15
      %p222 = scmp.lt.s32.totalorder %s15, 3
      %p223 = pnand %p221, %p222
      %p224 = pneg %p223
      // Predicated region
      $region37: #{tpu_custom_call.1} parent=5 // pred_check
        _
      $region38: #{tpu_custom_call.1} parent=5 // pred_check_branch
        %226 = sbr.rel (%p223) target = $region40
      $region39: #{tpu_custom_call.1} parent=5 // pred_region
        %s227 = ssub.s32 %s15, 1
        // Predicated region
        $region41: #{tpu_custom_call.1} parent=39 // pred_check
          %p228 = pneg %p114
        $region42: #{tpu_custom_call.1} parent=39 // pred_check_branch
          %230 = sbr.rel (%p228) target = $region44
        $region43: #{tpu_custom_call.1} parent=39 // pred_region
          %232 = dma.done [#allocation4], 512
        $region44: #{tpu_custom_call.1} parent=39 // pred_fallthru
          _
        %s233 = smul.u32 2, %s20
        %p234 = scmp.lt.s32.totalorder %s233, 3
        %s235 = scalar_select %p234, %s233, 3
        %s236 = smul.addr %s235, 8
        %s237 = scalar_lea.vmem %s0, %s236
        %p238 = pneg %p41
        %p239 = pneg %p38
        %p240 = scmp.lt.s32.totalorder %s20, 1
        %s241 = scalar_select %p240, %s20, 1
        %s242 = smul.addr %s241, 2
        %s243 = smul.addr %s242, 8
        %s244 = scalar_lea.vmem %s1, %s243
        %p245 = pneg %p67
        %p246 = pneg %p64
        %p247 = scmp.lt.s32.totalorder %s20, 1
        %s248 = scalar_select %p247, %s20, 1
        %s249 = smul.addr %s248, 4
        %s250 = scalar_lea.vmem %s2, %s249
        %p251 = pneg %p93
        %p252 = pneg %p90
        %p253 = pneg %p114
        %p254 = pneg %p111
        %p255 = pneg %p135
        %p256 = pneg %p132
        %p257 = pneg %p161
        %p258 = pneg %p158
        %s259 = sand.u32 %s148, 1
        %s260 = scalar_lea.sflag [#allocation5], %s259
        %s261 = sand.u32 %s148, 1
        %s262 = smul.addr %s261, 16
        %s263 = scalar_lea.vmem [#allocation6], %s262
        %s264 = smul.u32 2, %s20
        %p265 = scmp.lt.s32.totalorder %s264, 3
        %s266 = scalar_select %p265, %s264, 3
        %s267 = smul.addr %s266, 8
        %s268 = scalar_lea.vmem %s0, %s267
        %s269 = smul.u32 2, %s20
        %p270 = scmp.lt.s32.totalorder %s20, 1
        %s271 = scalar_select %p270, %s20, 1
        %s272 = smul.addr %s271, 2
        %s273 = smul.addr %s272, 8
        %s274 = scalar_lea.vmem %s1, %s273
        %p275 = scmp.lt.s32.totalorder %s20, 1
        %s276 = scalar_select %p275, %s20, 1
        %s277 = smul.addr %s276, 4
        %s278 = scalar_lea.vmem %s2, %s277
        %s279 = smul.u32 2, %s20
        %v280 = vld [vmem:[%s268] sm:$0xff]
        %v281 = vld [vmem:[%s268 + $0x8] sm:$0xff]
        %v282 = vld [vmem:[#allocation3] sm:$0xff]
        %v283 = vld [vmem:[#allocation3 + $0x8] sm:$0xff]
        %v284 = vld [vmem:[#allocation3 + $0x10] sm:$0xff]
        %v285 = vld [vmem:[#allocation3 + $0x18] sm:$0xff]
        %v286 = vld [vmem:[%s4] sm:$0x1]
        %v288 = vperm.slane %v286, 0
        %vm290 = vcmask 261120
        %v292 = vsel %vm290, %v280, 0
        %v295 = vsel %vm290, %v281, 0
        %297 = vmatpush.msra.mxu0 0.0
        %298 = vmatpush.msra.mxu0 0.0
        %299 = vmatpush.msra.mxu0 0.0
        %300 = vmatpush.msra.mxu0 0.0
        %301 = vmatpush.msra.mxu0 0.0
        %302 = vmatpush.msra.mxu0 0.0
        %303 = vmatpush.msra.mxu0 0.0
        %304 = vmatpush.msra.mxu0 0.0
        %305 = vmatpush.msra.mxu0 0.0
        %306 = vmatpush.msra.mxu0 0.0
        %307 = vmatpush.msra.mxu0 0.0
        %308 = vmatpush.msra.mxu0 0.0
        %309 = vmatpush.msra.mxu0 %v285
        %310 = vmatpush.msra.mxu0 %v284
        %311 = vmatpush.msra.mxu0 %v283
        %312 = vmatpush.msra.mxu0 %v282
        %313 = vmatmul.f32.gmra.mxu0 %v292
        %v314 = vpop.f32.mrf.mxu0
        %v315 = vadd.f32 %v288, %v314
        %316 = vmatmul.f32.gmra.mxu0 %v295
        %v317 = vpop.f32.mrf.mxu0
        %v318 = vadd.f32 %v288, %v317
        %319 = vdwg.mxu0
        %320 = vst [vmem:[#allocation2] sm:$0xff] %v315
        %321 = vst [vmem:[#allocation2 + $0x8] sm:$0xff] %v318
        %v322 = vlaneseq
        %v323 = vshrl.u32 %v322, 7
        %v324 = vadd.s32 %v323, 8
        %v325 = vlaneseq
        %v326 = vand.u32 %v325, 127
        %vm327 = vcmp.ne.s32.totalorder %v323, %v326
        %vm328 = vcmp.ne.s32.totalorder %v324, %v326
        %v329 = vsel %vm327, 0.5, 0.0
        %v330 = vsel %vm328, 0.5, 0.0
        %v331 = vld [vmem:[%s274] sm:$0xff]
        %v332 = vld [vmem:[%s274 + $0x8] sm:$0xff]
        %v333 = vld [vmem:[%s278] sm:$0x7]
        %335 = vset.pattern.permute.xlu0 0
        %336 = vperm.xlu0 %335, %v331
        %v337 = vpop.permute.xlu0 %336
        %340 = vset.pattern.permute.xlu0 0
        %341 = vperm.xlu0 %340, %v332
        %v342 = vpop.permute.xlu0 %341
        %v344 = vperm.slane %v333, 0
        %v345 = vsub.f32 %v337, %v344
        %v346 = vsub.f32 %v342, %v344
        %347 = vset.pattern.permute.xlu0 1
        %348 = vperm.xlu0 %347, %v331
        %v349 = vpop.permute.xlu0 %348
        %351 = vset.pattern.permute.xlu0 1
        %352 = vperm.xlu0 %351, %v332
        %v353 = vpop.permute.xlu0 %352
        %v355 = vperm.slane %v333, 1
        %v356 = vsub.f32 %v349, %v355
        %v357 = vsub.f32 %v353, %v355
        %358 = vset.pattern.permute.xlu0 2
        %359 = vperm.xlu0 %358, %v331
        %v360 = vpop.permute.xlu0 %359
        %362 = vset.pattern.permute.xlu0 2
        %363 = vperm.xlu0 %362, %v332
        %v364 = vpop.permute.xlu0 %363
        %v366 = vperm.slane %v333, 2
        %v367 = vsub.f32 %v360, %v366
        %v368 = vsub.f32 %v364, %v366
        %v369 = vmul.f32 %v345, %v345
        %v370 = vmul.f32 %v346, %v346
        %v371 = vmul.f32 %v356, %v356
        %v372 = vmul.f32 %v357, %v357
        %v373 = vadd.f32 %v369, %v371
        %v374 = vadd.f32 %v370, %v372
        %v375 = vmul.f32 %v367, %v367
        %v376 = vmul.f32 %v368, %v368
        %v377 = vadd.f32 %v373, %v375
        %v378 = vadd.f32 %v374, %v376
        %v379 = vmax.f32 %v377, 1e-12
        %v380 = vmax.f32 %v378, 1e-12
        %v381 = vrsqrt.pop %v379
        %v382 = vmul.f32 %v381, %v379
        %v383 = vmul.f32 %v382, %v381
        %v384 = vmul.f32 0.5, %v383
        %v385 = vsub.f32 1.5, %v384
        %v386 = vmul.f32 %v381, %v385
        %vm387 = vweird.f32 %v379
        %vm388 = vweird.f32 %v381
        %vm389 = vmor %vm387, %vm388
        %v390 = vsel %vm389, %v381, %v386
        %v391 = vrsqrt.pop %v380
        %v392 = vmul.f32 %v391, %v380
        %v393 = vmul.f32 %v392, %v391
        %v394 = vmul.f32 0.5, %v393
        %v395 = vsub.f32 1.5, %v394
        %v396 = vmul.f32 %v391, %v395
        %vm397 = vweird.f32 %v380
        %vm398 = vweird.f32 %v391
        %vm399 = vmor %vm397, %vm398
        %v400 = vsel %vm399, %v391, %v396
        %v401 = vmul.f32 %v379, %v390
        %v402 = vmul.f32 %v380, %v400
        %vm403 = vcmp.lt.f32.partialorder %v401, 2.5
        %vm404 = vcmp.lt.f32.partialorder %v402, 2.5
        %v405 = vmul.f32 %v401, 1.2566371
        %v406 = vmul.f32 %v402, 1.2566371
        %v407 = vand.u32 2147483647, %v405
        %vm408 = vcmp.le.f32.partialorder %v407, 0.7853982
        %vm409 = vcmp.lt.s32.totalorder %v405, 0
        %v410 = vand.u32 %v405, 2139095040
        %v411 = vshrl.u32 %v410, 23
        %v412 = vsub.s32 %v411, 127
        %v413 = vand.u32 2147483647, %v405
        %v414 = vand.u32 %v413, 8388607
        %v415 = vor.u32 %v414, 8388608
        %v416 = vsub.s32 0, %v415
        %v417 = vadd.s32 %v412, 1
        %vm418 = vcmp.gt.s32.totalorder %v417, 0
        %v419 = vsel %vm418, %v417, 0
        %v420 = vshrl.u32 %v419, 5
        %v421 = vand.u32 %v419, 31
        %v422 = vsub.s32 32, %v421
        %v423 = vshrl.u32 683565275, %v422
        %v424 = vshll.u32 683565275, %v421
        %v425 = vshrl.u32 2475754826, %v422
        %v426 = vor.u32 %v424, %v425
        %v427 = vshll.u32 2475754826, %v421
        %v428 = vshrl.u32 2131351028, %v422
        %v429 = vor.u32 %v427, %v428
        %v430 = vshll.u32 2131351028, %v421
        %v431 = vshrl.u32 2102212464, %v422
        %v432 = vor.u32 %v430, %v431
        %v433 = vshll.u32 2102212464, %v421
        %v434 = vshrl.u32 920167782, %v422
        %v435 = vor.u32 %v433, %v434
        %v436 = vshll.u32 920167782, %v421
        %v437 = vshrl.u32 1326507024, %v422
        %v438 = vor.u32 %v436, %v437
        %vm439 = vcmp.lt.s32.totalorder %v420, 1
        %vm440 = vcmp.lt.s32.totalorder %v420, 2
        %vm441 = vcmp.lt.s32.totalorder %v420, 3
        %vm442 = vcmp.lt.s32.totalorder %v420, 4
        %v443 = vsel %vm439, %v423, %v426
        %v444 = vsel %vm442, %v432, 2102212464
        %v445 = vsel %vm441, %v429, %v444
        %v446 = vsel %vm440, %v443, %v445
        %v447 = vsel %vm439, %v426, %v429
        %v448 = vsel %vm442, %v435, 920167782
        %v449 = vsel %vm441, %v432, %v448
        %v450 = vsel %vm440, %v447, %v449
        %v451 = vsel %vm439, %v429, %v432
        %v452 = vsel %vm442, %v438, 1326507024
        %v453 = vsel %vm441, %v435, %v452
        %v454 = vsel %vm440, %v451, %v453
        %v455 = vshll.u32 %v415, 8
        %v456 = vand.u32 %v455, 65535
        %v457 = vshrl.u32 %v455, 16
        %v458 = vand.u32 %v454, 65535
        %v459 = vshrl.u32 %v454, 16
        %v460 = vmul.u32 %v456, %v458
        %v461 = vmul.u32 %v456, %v459
        %v462 = vmul.u32 %v457, %v458
        %v463 = vmul.u32 %v457, %v459
        %v464 = vshll.u32 %v461, 16
        %v465 = vshrl.u32 %v461, 16
        %v466 = vshll.u32 %v462, 16
        %v467 = vshrl.u32 %v462, 16
        %vm468 = vc.u32 %v460, %v464
        %v469 = vsel %vm468, 1, 0
        %v470 = vadd.s32 %v460, %v464
        %v471 = vadd.s32 %v463, %v469
        %vm472 = vc.u32 %v470, %v466
        %v473 = vsel %vm472, 1, 0
        %v474 = vadd.s32 %v470, %v466
        %v475 = vadd.s32 %v471, %v473
        %v476 = vadd.s32 %v475, %v465
        %v477 = vadd.s32 %v476, %v467
        %v478 = vand.u32 %v455, 65535
        %v479 = vshrl.u32 %v455, 16
        %v480 = vand.u32 %v450, 65535
        %v481 = vshrl.u32 %v450, 16
        %v482 = vmul.u32 %v478, %v480
        %v483 = vmul.u32 %v478, %v481
        %v484 = vmul.u32 %v479, %v480
        %v485 = vmul.u32 %v479, %v481
        %v486 = vshll.u32 %v483, 16
        %v487 = vshrl.u32 %v483, 16
        %v488 = vshll.u32 %v484, 16
        %v489 = vshrl.u32 %v484, 16
        %vm490 = vc.u32 %v482, %v486
        %v491 = vsel %vm490, 1, 0
        %v492 = vadd.s32 %v482, %v486
        %v493 = vadd.s32 %v485, %v491
        %vm494 = vc.u32 %v492, %v488
        %v495 = vsel %vm494, 1, 0
        %v496 = vadd.s32 %v492, %v488
        %v497 = vadd.s32 %v493, %v495
        %v498 = vadd.s32 %v497, %v487
        %v499 = vadd.s32 %v498, %v489
        %v500 = vmul.u32 %v455, %v446
        %v501 = vadd.s32 %v477, %v496
        %vm502 = vc.u32 %v477, %v496
        %v503 = vadd.s32 %v499, 1
        %v504 = vsel %vm502, %v503, %v499
        %v505 = vadd.s32 %v500, %v504
        %v506 = vadd.s32 %v505, 536870912
        %v507 = vshrl.u32 %v506, 30
        %v508 = vshll.u32 %v507, 30
        %v509 = vsub.s32 %v505, %v508
        %vm510 = vcmp.lt.s32.totalorder %v509, 0
        %v511 = vsub.s32 0, %v509
        %v512 = vsel %vm510, %v511, %v509
        %v513 = vclz %v512
        %v514 = vsub.s32 %v513, 2
        %vm515 = vcmp.gt.s32.totalorder 0, %v514
        %v516 = vsel %vm515, 0, %v514
        %v517 = vsub.s32 32, %v516
        %v518 = vshll.u32 %v509, %v516
        %v519 = vshrl.u32 %v501, %v517
        %v520 = vor.u32 %v518, %v519
        %v521 = vsub.s32 4294967266, %v516
        %v522 = vadd.s32 %v521, 127
        %v523 = vshll.u32 %v522, 23
        %v524 = vor.u32 4788187, %v523
        %v525 = vand.u32 2147483647, %v524
        %v527 = vcvt.s32.f32 %v520
        %v528 = vmul.f32 %v527, %v525
        %v529 = vxor.u32 %v528, 2147483648
        %v530 = vsel %vm409, %v529, %v528
        %v531 = vsub.s32 4, %v507
        %v532 = vsel %vm409, %v531, %v507
        %v533 = vsel %vm408, %v405, %v530
        %v534 = vsel %vm408, 0, %v532
        %v535 = vmul.f32 %v533, %v533
        %v536 = vmul.f32 %v535, -0.001358992
        %v537 = vadd.f32 %v536, 0.041655596
        %v538 = vmul.f32 %v535, %v537
        %v539 = vadd.f32 %v538, -0.4999988
        %v540 = vmul.f32 %v535, %v539
        %v541 = vadd.f32 1.0, %v540
        %v542 = vmul.f32 %v533, %v533
        %v543 = vmul.f32 %v542, -0.00019511016
        %v544 = vadd.f32 %v543, 0.008332121
        %v545 = vmul.f32 %v542, %v544
        %v546 = vadd.f32 %v545, -0.16666654
        %v547 = vmul.f32 %v542, %v546
        %v548 = vadd.f32 %v547, 1.0
        %v549 = vmul.f32 %v548, %v533
        %vm550 = vweird.f32 %v405
        %v551 = vand.u32 %v534, 3
        %vm552 = vcmp.lt.s32.totalorder %v551, 2
        %vm553 = vcmp.eq.s32.totalorder %v551, 0
        %v554 = vxor.u32 %v549, 2147483648
        %v555 = vsel %vm553, %v541, %v554
        %vm556 = vcmp.eq.s32.totalorder %v551, 2
        %v557 = vxor.u32 %v541, 2147483648
        %v558 = vsel %vm556, %v557, %v549
        %v559 = vsel %vm552, %v555, %v558
        %v560 = vsel %vm550, nan, %v559
        %v561 = vand.u32 2147483647, %v406
        %vm562 = vcmp.le.f32.partialorder %v561, 0.7853982
        %vm563 = vcmp.lt.s32.totalorder %v406, 0
        %v564 = vand.u32 %v406, 2139095040
        %v565 = vshrl.u32 %v564, 23
        %v566 = vsub.s32 %v565, 127
        %v567 = vand.u32 2147483647, %v406
        %v568 = vand.u32 %v567, 8388607
        %v569 = vor.u32 %v568, 8388608
        %v570 = vsub.s32 0, %v569
        %v571 = vadd.s32 %v566, 1
        %vm572 = vcmp.gt.s32.totalorder %v571, 0
        %v573 = vsel %vm572, %v571, 0
        %v574 = vshrl.u32 %v573, 5
        %v575 = vand.u32 %v573, 31
        %v576 = vsub.s32 32, %v575
        %v577 = vshrl.u32 683565275, %v576
        %v578 = vshll.u32 683565275, %v575
        %v579 = vshrl.u32 2475754826, %v576
        %v580 = vor.u32 %v578, %v579
        %v581 = vshll.u32 2475754826, %v575
        %v582 = vshrl.u32 2131351028, %v576
        %v583 = vor.u32 %v581, %v582
        %v584 = vshll.u32 2131351028, %v575
        %v585 = vshrl.u32 2102212464, %v576
        %v586 = vor.u32 %v584, %v585
        %v587 = vshll.u32 2102212464, %v575
        %v588 = vshrl.u32 920167782, %v576
        %v589 = vor.u32 %v587, %v588
        %v590 = vshll.u32 920167782, %v575
        %v591 = vshrl.u32 1326507024, %v576
        %v592 = vor.u32 %v590, %v591
        %vm593 = vcmp.lt.s32.totalorder %v574, 1
        %vm594 = vcmp.lt.s32.totalorder %v574, 2
        %vm595 = vcmp.lt.s32.totalorder %v574, 3
        %vm596 = vcmp.lt.s32.totalorder %v574, 4
        %v597 = vsel %vm593, %v577, %v580
        %v598 = vsel %vm596, %v586, 2102212464
        %v599 = vsel %vm595, %v583, %v598
        %v600 = vsel %vm594, %v597, %v599
        %v601 = vsel %vm593, %v580, %v583
        %v602 = vsel %vm596, %v589, 920167782
        %v603 = vsel %vm595, %v586, %v602
        %v604 = vsel %vm594, %v601, %v603
        %v605 = vsel %vm593, %v583, %v586
        %v606 = vsel %vm596, %v592, 1326507024
        %v607 = vsel %vm595, %v589, %v606
        %v608 = vsel %vm594, %v605, %v607
        %v609 = vshll.u32 %v569, 8
        %v610 = vand.u32 %v609, 65535
        %v611 = vshrl.u32 %v609, 16
        %v612 = vand.u32 %v608, 65535
        %v613 = vshrl.u32 %v608, 16
        %v614 = vmul.u32 %v610, %v612
        %v615 = vmul.u32 %v610, %v613
        %v616 = vmul.u32 %v611, %v612
        %v617 = vmul.u32 %v611, %v613
        %v618 = vshll.u32 %v615, 16
        %v619 = vshrl.u32 %v615, 16
        %v620 = vshll.u32 %v616, 16
        %v621 = vshrl.u32 %v616, 16
        %vm622 = vc.u32 %v614, %v618
        %v623 = vsel %vm622, 1, 0
        %v624 = vadd.s32 %v614, %v618
        %v625 = vadd.s32 %v617, %v623
        %vm626 = vc.u32 %v624, %v620
        %v627 = vsel %vm626, 1, 0
        %v628 = vadd.s32 %v624, %v620
        %v629 = vadd.s32 %v625, %v627
        %v630 = vadd.s32 %v629, %v619
        %v631 = vadd.s32 %v630, %v621
        %v632 = vand.u32 %v609, 65535
        %v633 = vshrl.u32 %v609, 16
        %v634 = vand.u32 %v604, 65535
        %v635 = vshrl.u32 %v604, 16
        %v636 = vmul.u32 %v632, %v634
        %v637 = vmul.u32 %v632, %v635
        %v638 = vmul.u32 %v633, %v634
        %v639 = vmul.u32 %v633, %v635
        %v640 = vshll.u32 %v637, 16
        %v641 = vshrl.u32 %v637, 16
        %v642 = vshll.u32 %v638, 16
        %v643 = vshrl.u32 %v638, 16
        %vm644 = vc.u32 %v636, %v640
        %v645 = vsel %vm644, 1, 0
        %v646 = vadd.s32 %v636, %v640
        %v647 = vadd.s32 %v639, %v645
        %vm648 = vc.u32 %v646, %v642
        %v649 = vsel %vm648, 1, 0
        %v650 = vadd.s32 %v646, %v642
        %v651 = vadd.s32 %v647, %v649
        %v652 = vadd.s32 %v651, %v641
        %v653 = vadd.s32 %v652, %v643
        %v654 = vmul.u32 %v609, %v600
        %v655 = vadd.s32 %v631, %v650
        %vm656 = vc.u32 %v631, %v650
        %v657 = vadd.s32 %v653, 1
        %v658 = vsel %vm656, %v657, %v653
        %v659 = vadd.s32 %v654, %v658
        %v660 = vadd.s32 %v659, 536870912
        %v661 = vshrl.u32 %v660, 30
        %v662 = vshll.u32 %v661, 30
        %v663 = vsub.s32 %v659, %v662
        %vm664 = vcmp.lt.s32.totalorder %v663, 0
        %v665 = vsub.s32 0, %v663
        %v666 = vsel %vm664, %v665, %v663
        %v667 = vclz %v666
        %v668 = vsub.s32 %v667, 2
        %vm669 = vcmp.gt.s32.totalorder 0, %v668
        %v670 = vsel %vm669, 0, %v668
        %v671 = vsub.s32 32, %v670
        %v672 = vshll.u32 %v663, %v670
        %v673 = vshrl.u32 %v655, %v671
        %v674 = vor.u32 %v672, %v673
        %v675 = vsub.s32 4294967266, %v670
        %v676 = vadd.s32 %v675, 127
        %v677 = vshll.u32 %v676, 23
        %v678 = vor.u32 4788187, %v677
        %v679 = vand.u32 2147483647, %v678
        %v681 = vcvt.s32.f32 %v674
        %v682 = vmul.f32 %v681, %v679
        %v683 = vxor.u32 %v682, 2147483648
        %v684 = vsel %vm563, %v683, %v682
        %v685 = vsub.s32 4, %v661
        %v686 = vsel %vm563, %v685, %v661
        %v687 = vsel %vm562, %v406, %v684
        %v688 = vsel %vm562, 0, %v686
        %v689 = vmul.f32 %v687, %v687
        %v690 = vmul.f32 %v689, -0.001358992
        %v691 = vadd.f32 %v690, 0.041655596
        %v692 = vmul.f32 %v689, %v691
        %v693 = vadd.f32 %v692, -0.4999988
        %v694 = vmul.f32 %v689, %v693
        %v695 = vadd.f32 1.0, %v694
        %v696 = vmul.f32 %v687, %v687
        %v697 = vmul.f32 %v696, -0.00019511016
        %v698 = vadd.f32 %v697, 0.008332121
        %v699 = vmul.f32 %v696, %v698
        %v700 = vadd.f32 %v699, -0.16666654
        %v701 = vmul.f32 %v696, %v700
        %v702 = vadd.f32 %v701, 1.0
        %v703 = vmul.f32 %v702, %v687
        %vm704 = vweird.f32 %v406
        %v705 = vand.u32 %v688, 3
        %vm706 = vcmp.lt.s32.totalorder %v705, 2
        %vm707 = vcmp.eq.s32.totalorder %v705, 0
        %v708 = vxor.u32 %v703, 2147483648
        %v709 = vsel %vm707, %v695, %v708
        %vm710 = vcmp.eq.s32.totalorder %v705, 2
        %v711 = vxor.u32 %v695, 2147483648
        %v712 = vsel %vm710, %v711, %v703
        %v713 = vsel %vm706, %v709, %v712
        %v714 = vsel %vm704, nan, %v713
        %v715 = vadd.f32 %v560, 1.0
        %v716 = vadd.f32 %v714, 1.0
        %v717 = vmul.f32 %v715, 0.5
        %v718 = vmul.f32 %v716, 0.5
        %v719 = vsel %vm403, %v717, 0.0
        %v720 = vsel %vm404, %v718, 0.0
        %v721 = vsub.f32 1.0, %v719
        %v722 = vsub.f32 1.0, %v720
        %v723 = vmul.f32 %v390, %v721
        %v724 = vmul.f32 %v400, %v722
        %v725 = vmul.f32 %v723, %v329
        %v726 = vmul.f32 %v724, %v330
        %v727 = vld [vmem:[#allocation2] sm:$0xff]
        %v728 = vld [vmem:[#allocation2 + $0x8] sm:$0xff]
        %vm729 = vcmask 130048
        %v731 = vsel %vm729, %v725, 0
        %v734 = vsel %vm729, %v726, 0
        %736 = vmatpush.msra.mxu0 0.0
        %737 = vmatpush.msra.mxu0 0.0
        %738 = vmatpush.msra.mxu0 0.0
        %739 = vmatpush.msra.mxu0 0.0
        %740 = vmatpush.msra.mxu0 0.0
        %741 = vmatpush.msra.mxu0 0.0
        %742 = vmatpush.msra.mxu0 0.0
        %743 = vmatpush.msra.mxu0 0.0
        %744 = vmatpush.msra.mxu0 0.0
        %745 = vmatpush.msra.mxu0 0.0
        %746 = vmatpush.msra.mxu0 0.0
        %747 = vmatpush.msra.mxu0 0.0
        %748 = vmatpush.msra.mxu0 0.0
        %749 = vmatpush.msra.mxu0 0.0
        %750 = vmatpush.msra.mxu0 %v728
        %751 = vmatpush.msra.mxu0 %v727
        %752 = vmatmul.f32.gmra.mxu0 %v731
        %v753 = vpop.f32.mrf.mxu0
        %v754 = vadd.f32 0.0, %v753
        %755 = vmatmul.f32.gmra.mxu0 %v734
        %v756 = vpop.f32.mrf.mxu0
        %v757 = vadd.f32 0.0, %v756
        %758 = vdwg.mxu0
        %v759 = vmul.f32 %v754, %v727
        %v760 = vmul.f32 %v757, %v728
        %761 = vst [vmem:[%s263] sm:$0xff] %v759
        %762 = vst [vmem:[%s263 + $0x8] sm:$0xff] %v760
        %s763 = sand.u32 %s148, 1
        %s764 = scalar_lea.sflag [#allocation5], %s763
        %s765 = sand.u32 %s148, 1
        %s766 = smul.addr %s765, 16
        %s767 = scalar_lea.vmem [#allocation6], %s766
        // Predicated region
        $region45: #{tpu_custom_call.1} parent=39 // pred_check
          %p768 = pneg %p158
        $region46: #{tpu_custom_call.1} parent=39 // pred_check_branch
          %770 = sbr.rel (%p768) target = $region48
        $region47: #{tpu_custom_call.1} parent=39 // pred_region
          %s771 = smul.u32 2, %s20
          %773 = vsyncadd %s764, 0
          %s774 = smul.addr %s771, 8
          %s775 = scalar_lea.hbm %s5, %s774
          %s776 = sshll.u32 %s767, 4
          %s777 = int_to_ptr.vmem [resolvable:$true] %s776
          %s778 = sshll.u32 %s775, 4
          %s779 = int_to_ptr.hbm [resolvable:$true] %s778
          %784 = dma.vmem_to_hbm [thread:$0]  %s777, 256, %s779, %s764, 128, 128, 8
        $region48: #{tpu_custom_call.1} parent=39 // pred_fallthru
          _
      $region40: #{tpu_custom_call.1} parent=5 // pred_fallthru
        _
      %p785 = scmp.le.s32.totalorder 2, %s15
      // Predicated region
      $region49: #{tpu_custom_call.1} parent=5 // pred_check
        %p786 = pneg %p785
      $region50: #{tpu_custom_call.1} parent=5 // pred_check_branch
        %788 = sbr.rel (%p786) target = $region52
      $region51: #{tpu_custom_call.1} parent=5 // pred_region
        %s789 = ssub.s32 %s15, 2
        // Predicated region
        $region53: #{tpu_custom_call.1} parent=51 // pred_check
          %p790 = pneg %p164
        $region54: #{tpu_custom_call.1} parent=51 // pred_check_branch
          %792 = sbr.rel (%p790) target = $region56
        $region55: #{tpu_custom_call.1} parent=51 // pred_region
          %s793 = sand.u32 %s149, 1
          %s794 = scalar_lea.sflag [#allocation5], %s793
          %s795 = sand.u32 %s149, 1
          %s796 = smul.addr %s795, 16
          %s797 = scalar_lea.vmem [#allocation6], %s796
          %799 = dma.done %s794, 256
        $region56: #{tpu_custom_call.1} parent=51 // pred_fallthru
          _
      $region52: #{tpu_custom_call.1} parent=5 // pred_fallthru
        _
    $region6: #{tpu_custom_call.1} parent=1 // loop_footer
      %s19 = sadd.s32 1, %s15
    $region7: #{tpu_custom_call.1} parent=1 // loop_footer_branch
      %14 = sbr.rel target = $region3
    $region8: #{tpu_custom_call.1} parent=1 // loop_exit
      _
    %800 = vsyncpa [#allocation4], 1
    %s801 = scalar_lea.sflag [#allocation4], 1
    %802 = vsyncpa %s801, 1
    %803 = vsyncpa [#allocation5], 1
    %s804 = scalar_lea.sflag [#allocation5], 1
    %805 = vsyncpa %s804, 1

</llo_original>
